<compile_context>
chip_gen: v5e
topology: v5e:2x2
jax: 0.10.0
libtpu: 0.0.40
codegen_flags: <defaults>
</compile_context>

<pallas_src>
import functools

import numpy as np

import jax
import jax.numpy as jnp
from jax import lax
from jax.experimental import pallas as pl
from jax.experimental.pallas import tpu as pltpu


# TODO(synk): `create_kernel` is not provided in the source module; synthesize a deterministic
# Hamming-windowed sinc (cutoff 0.5) lowpass kernel with a width-dependent odd size.
def _create_kernel_1d(width):
    K = int(max(3, 2 * (width // 4) + 1))  # odd kernel size
    n = np.arange(K, dtype=np.float64) - (K - 1) / 2.0
    cutoff = 0.5
    sinc = 2.0 * cutoff * np.sinc(2.0 * cutoff * n)
    window = 0.54 + 0.46 * np.cos(2.0 * np.pi * n / (K - 1))  # Hamming
    return sinc * window


def create_kernel(width, normalized=True):
    k1 = _create_kernel_1d(width)
    k2 = np.outer(k1, k1)
    if normalized:
        k2 = k2 / k2.sum()
    return jnp.asarray(k2, dtype=jnp.float32)


def _lowpass_sep_kernel(x_ref, o_ref, xpad_ref, tmp_ref, *, H, W, half, taps):
    # x_ref:    (H, W, Ct)             input tile, lane axis = flattened batch*channel
    # o_ref:    (H, W, Ct)             output tile ("same"-size conv)
    # xpad_ref: (H, W+2h, Ct) f32      W-zero-padded input (border columns zeroed only)
    # tmp_ref:  (H+2h, W, Ct) f32      horizontal-pass result with zeroed top/bottom bands
    K = len(taps)
    ct = x_ref.shape[-1]
    f32 = jnp.float32

    # --- fused zero padding along W: zero only the border columns, single f32 cast of the
    #     input into the interior.  (Kept per grid step: scratch is reused every step.)
    xpad_ref[:, 0:half, :] = jnp.zeros((H, half, ct), f32)
    xpad_ref[:, half + W:half + W + half, :] = jnp.zeros((H, half, ct), f32)
    xpad_ref[:, half:half + W, :] = x_ref[...].astype(f32)

    # --- zero padding along H = zeroed top/bottom bands of the horizontal-pass buffer.
    tmp_ref[0:half, :, :] = jnp.zeros((half, W, ct), f32)
    tmp_ref[half + H:half + H + half, :, :] = jnp.zeros((half, W, ct), f32)

    # --- horizontal K-tap pass (shifts along W = sublane axis), register accumulation.
    #     Chunked into groups of 8 taps so very large K cannot blow register pressure;
    #     each group issues exactly one VMEM store (first group) or one read-modify-write.
    GROUP = 8
    for g in range(0, K, GROUP):
        g_end = min(g + GROUP, K)
        part = taps[g] * xpad_ref[:, g:g + W, :]
        for j in range(g + 1, g_end):
            part = part + taps[j] * xpad_ref[:, j:j + W, :]
        if g == 0:
            tmp_ref[half:half + H, :, :] = part
        else:
            tmp_ref[half:half + H, :, :] += part

    # --- vertical K-tap pass (shifts along H = leading axis: pure address offsets), full
    #     register accumulation and a single store straight to the output block.
    v_acc = taps[0] * tmp_ref[0:H, :, :]
    for i in range(1, K):
        v_acc = v_acc + taps[i] * tmp_ref[i:i + H, :, :]
    o_ref[...] = v_acc.astype(o_ref.dtype)


def _ceil_to(v, m):
    return -(-int(v) // int(m)) * int(m)


def lowpass_windowed_sinc(x, pad=True):
    """Matches LowPassWindowedSinc.forward (pad=True path used by DownSample2d)."""
    # TODO(synk): pad=False path of LowPassWindowedSinc not implemented (unused by DownSample2d).
    assert pad
    shape = x.shape
    H, W = int(shape[-2]), int(shape[-1])

    # Separable 1-D taps; normalizing k1 by sum(k1) gives outer(k1n, k1n) == k2 / sum(k2).
    k1 = _create_kernel_1d(W)
    k1 = k1 / k1.sum()
    taps = tuple(float(v) for v in k1.astype(np.float32))
    K = len(taps)
    half = K // 2
    Hp, Wp = H + 2 * half, W + 2 * half

    N = 1
    for d in shape[:-2]:
        N *= int(d)

    # Lane-dense relayout: (H, W, B*C).  One fused XLA copy each way.
    # TODO(synk): fold this relayout into the kernel once Mosaic supports the minor-dim swap.
    xl = jnp.transpose(x.reshape(N, H, W), (1, 2, 0))

    # ---- generation-aware sizing -------------------------------------------------------
    vmem_cap = None
    try:
        vmem_cap = int(pltpu.get_tpu_info().vmem_capacity_bytes)
    except Exception:
        vmem_cap = None
    try:
        kind = jax.devices()[0].device_kind.lower()
    except Exception:
        kind = ""
    if vmem_cap is None:
        vmem_cap = 64 * 1024 * 1024  # conservative fallback (v7x per-TensorCore VMEM)

    # v7x-like chips: 2 TensorCores per chip, 64 MiB VMEM per core.
    n_tc = 2 if (vmem_cap <= 64 * 1024 * 1024 or "7" in kind) else 1

    if vmem_cap >= 100 * 1024 * 1024:        # v5e / v6e: 128 MiB physical VMEM
        budget = 48 * 1024 * 1024
        vmem_limit = 96 * 1024 * 1024
    else:                                    # v7x: 64 MiB per TensorCore
        budget = 24 * 1024 * 1024
        vmem_limit = 48 * 1024 * 1024

    # Per-128-lane VMEM footprint, with (8,128) sublane rounding and true input itemsize.
    itemsize = int(jnp.dtype(x.dtype).itemsize)
    sub = max(8, 32 // itemsize)             # sublane multiple: 8 (f32), 16 (bf16), 32 (i8)
    lane = 128
    bytes_per_unit = (
        2 * H * _ceil_to(W, sub) * lane * itemsize      # input block, double-buffered
        + 2 * H * _ceil_to(W, sub) * lane * itemsize    # output block, double-buffered
        + H * _ceil_to(Wp, 8) * lane * 4                # xpad scratch (f32)
        + Hp * _ceil_to(W, 8) * lane * 4                # tmp scratch (f32)
    )

    lanes = pl.cdiv(N, 128)
    units_budget = max(1, budget // bytes_per_unit)
    if n_tc >= 2:
        # >= 2 grid steps per TensorCore so each core keeps DMA/compute overlap.
        min_steps = 2 * n_tc
        target_units = max(1, lanes // min_steps) if lanes >= min_steps else 1
    else:
        # Single TensorCore (v5e/v6e): take the biggest block the budget allows.
        target_units = lanes
    ct_units = max(1, min(units_budget, target_units, lanes))
    ct = 128 * ct_units
    n_pad = pl.cdiv(N, ct) * ct

    required = bytes_per_unit * ct_units
    vmem_limit = int(min(max(vmem_limit, required + (8 << 20)),
                         max(48 << 20, vmem_cap - (8 << 20))))
    # -------------------------------------------------------------------------------------

    if n_pad > N:
        xl = jnp.pad(xl, ((0, 0), (0, 0), (0, n_pad - N)))

    out = pl.pallas_call(
        functools.partial(_lowpass_sep_kernel, H=H, W=W, half=half, taps=taps),
        out_shape=jax.ShapeDtypeStruct((H, W, n_pad), x.dtype),
        grid=(n_pad // ct,),
        in_specs=[pl.BlockSpec((H, W, ct), lambda c: (0, 0, c))],
        out_specs=pl.BlockSpec((H, W, ct), lambda c: (0, 0, c)),
        scratch_shapes=[
            pltpu.VMEM((H, Wp, ct), jnp.float32),   # W-padded input (borders zeroed only)
            pltpu.VMEM((Hp, W, ct), jnp.float32),   # horizontal pass + H zero bands
        ],
        compiler_params=pltpu.CompilerParams(
            dimension_semantics=("parallel",),
            vmem_limit_bytes=vmem_limit,
        ),
    )(xl)

    out = jnp.transpose(out[:, :, :N], (2, 0, 1))
    return out.reshape(shape)


def downsample2d(x, ratio=2):
    """Matches DownSample2d.forward: strided decimation starting at index 1, then lowpass."""
    x = x[..., 1::ratio, 1::ratio]
    return lowpass_windowed_sinc(x, pad=True)


def _reference(x, ratio=2):
    # Pure-JAX reference (lax conv with the full 2-D kernel) for correctness checking.
    xd = x[..., 1::ratio, 1::ratio]
    shape = xd.shape
    H, W = shape[-2], shape[-1]
    kernel = create_kernel(W, True)
    K = kernel.shape[-1]
    half = K // 2
    xb = xd.reshape(-1, 1, H, W)
    out = lax.conv_general_dilated(
        xb.astype(jnp.float32),
        kernel[None, None].astype(jnp.float32),
        window_strides=(1, 1),
        padding=[(half, half), (half, half)],
        dimension_numbers=("NCHW", "OIHW", "NCHW"),
    )
    return out.reshape(shape).astype(x.dtype)


if __name__ == "__main__":
    key = jax.random.PRNGKey(0)
    x = jax.random.normal(key, (2, 4, 16, 16), dtype=jnp.float32)

    y = downsample2d(x, ratio=2)
    y = jax.block_until_ready(y)

    y_ref = _reference(x, ratio=2)
    assert y.shape == (2, 4, 8, 8), y.shape
    assert jnp.allclose(y, y_ref, atol=1e-5, rtol=1e-5), "mismatch vs reference"

    print("KERNEL_OK")
</pallas_src>

<mosaic_0001>
module attributes {stable_mosaic.version = 11 : i64} {
  func.func @_lowpass_sep_kernel(%arg0: i32, %arg1: memref<8x8x128xf32, #tpu.memory_space<vmem>>, %arg2: memref<8x8x128xf32, #tpu.memory_space<vmem>>, %arg3: memref<8x12x128xf32, #tpu.memory_space<vmem>>, %arg4: memref<12x8x128xf32, #tpu.memory_space<vmem>>) attributes {dimension_semantics = [#tpu.dimension_semantics<parallel>], iteration_bounds = array<i64: 1>, scalar_prefetch = 0 : i64, scratch_operands = 2 : i64, tpu.core_type = #tpu.core_type<tc>, window_params = [{transform_indices = @transform_0, window_bounds = array<i64: 8, 8, 128>}, {transform_indices = @transform_1, window_bounds = array<i64: 8, 8, 128>}]} {
    %cst = arith.constant 0.000000e+00 : f32
    %0 = vector.broadcast %cst : f32 to vector<8x2x128xf32>
    %c0 = arith.constant 0 : index
    %c0_0 = arith.constant 0 : index
    %c0_1 = arith.constant 0 : index
    %1 = vector.load %arg3[%c0, %c0_0, %c0_1] : memref<8x12x128xf32, #tpu.memory_space<vmem>>, vector<8x2x128xf32>
    tpu.vector_store %arg3[%c0, %c0_0, %c0_1], %0 {strides = array<i32>} : memref<8x12x128xf32, #tpu.memory_space<vmem>>, vector<8x2x128xf32>,
    %cst_2 = arith.constant 0.000000e+00 : f32
    %2 = vector.broadcast %cst_2 : f32 to vector<8x2x128xf32>
    %c0_3 = arith.constant 0 : index
    %c10 = arith.constant 10 : index
    %c0_4 = arith.constant 0 : index
    %3 = vector.load %arg3[%c0_3, %c10, %c0_4] : memref<8x12x128xf32, #tpu.memory_space<vmem>>, vector<8x2x128xf32>
    tpu.vector_store %arg3[%c0_3, %c10, %c0_4], %2 {strides = array<i32>} : memref<8x12x128xf32, #tpu.memory_space<vmem>>, vector<8x2x128xf32>,
    %c0_5 = arith.constant 0 : index
    %c0_6 = arith.constant 0 : index
    %c0_7 = arith.constant 0 : index
    %4 = vector.load %arg1[%c0_5, %c0_6, %c0_7] : memref<8x8x128xf32, #tpu.memory_space<vmem>>, vector<8x8x128xf32>
    %c0_8 = arith.constant 0 : index
    %c2 = arith.constant 2 : index
    %c0_9 = arith.constant 0 : index
    %5 = vector.load %arg3[%c0_8, %c2, %c0_9] : memref<8x12x128xf32, #tpu.memory_space<vmem>>, vector<8x8x128xf32>
    tpu.vector_store %arg3[%c0_8, %c2, %c0_9], %4 {strides = array<i32>} : memref<8x12x128xf32, #tpu.memory_space<vmem>>, vector<8x8x128xf32>,
    %cst_10 = arith.constant 0.000000e+00 : f32
    %6 = vector.broadcast %cst_10 : f32 to vector<2x8x128xf32>
    %c0_11 = arith.constant 0 : index
    %c0_12 = arith.constant 0 : index
    %c0_13 = arith.constant 0 : index
    %7 = vector.load %arg4[%c0_11, %c0_12, %c0_13] : memref<12x8x128xf32, #tpu.memory_space<vmem>>, vector<2x8x128xf32>
    tpu.vector_store %arg4[%c0_11, %c0_12, %c0_13], %6 {strides = array<i32>} : memref<12x8x128xf32, #tpu.memory_space<vmem>>, vector<2x8x128xf32>,
    %cst_14 = arith.constant 0.000000e+00 : f32
    %8 = vector.broadcast %cst_14 : f32 to vector<2x8x128xf32>
    %c10_15 = arith.constant 10 : index
    %c0_16 = arith.constant 0 : index
    %c0_17 = arith.constant 0 : index
    %9 = vector.load %arg4[%c10_15, %c0_16, %c0_17] : memref<12x8x128xf32, #tpu.memory_space<vmem>>, vector<2x8x128xf32>
    tpu.vector_store %arg4[%c10_15, %c0_16, %c0_17], %8 {strides = array<i32>} : memref<12x8x128xf32, #tpu.memory_space<vmem>>, vector<2x8x128xf32>,
    %c0_18 = arith.constant 0 : index
    %c0_19 = arith.constant 0 : index
    %c0_20 = arith.constant 0 : index
    %10 = vector.load %arg3[%c0_18, %c0_19, %c0_20] : memref<8x12x128xf32, #tpu.memory_space<vmem>>, vector<8x8x128xf32>
    %cst_21 = arith.constant -3.1185375E-18 : f32
    %11 = vector.broadcast %cst_21 : f32 to vector<8x8x128xf32>
    %12 = arith.mulf %11, %10 : vector<8x8x128xf32>
    %c0_22 = arith.constant 0 : index
    %c1 = arith.constant 1 : index
    %c0_23 = arith.constant 0 : index
    %13 = vector.load %arg3[%c0_22, %c1, %c0_23] : memref<8x12x128xf32, #tpu.memory_space<vmem>>, vector<8x8x128xf32>
    %cst_24 = arith.constant 2.10501286E-17 : f32
    %14 = vector.broadcast %cst_24 : f32 to vector<8x8x128xf32>
    %15 = arith.mulf %14, %13 : vector<8x8x128xf32>
    %16 = arith.addf %12, %15 : vector<8x8x128xf32>
    %c0_25 = arith.constant 0 : index
    %c2_26 = arith.constant 2 : index
    %c0_27 = arith.constant 0 : index
    %17 = vector.load %arg3[%c0_25, %c2_26, %c0_27] : memref<8x12x128xf32, #tpu.memory_space<vmem>>, vector<8x8x128xf32>
    %cst_28 = arith.constant 1.000000e+00 : f32
    %18 = vector.broadcast %cst_28 : f32 to vector<8x8x128xf32>
    %19 = arith.mulf %18, %17 : vector<8x8x128xf32>
    %20 = arith.addf %16, %19 : vector<8x8x128xf32>
    %c0_29 = arith.constant 0 : index
    %c3 = arith.constant 3 : index
    %c0_30 = arith.constant 0 : index
    %21 = vector.load %arg3[%c0_29, %c3, %c0_30] : memref<8x12x128xf32, #tpu.memory_space<vmem>>, vector<8x8x128xf32>
    %cst_31 = arith.constant 2.10501286E-17 : f32
    %22 = vector.broadcast %cst_31 : f32 to vector<8x8x128xf32>
    %23 = arith.mulf %22, %21 : vector<8x8x128xf32>
    %24 = arith.addf %20, %23 : vector<8x8x128xf32>
    %c0_32 = arith.constant 0 : index
    %c4 = arith.constant 4 : index
    %c0_33 = arith.constant 0 : index
    %25 = vector.load %arg3[%c0_32, %c4, %c0_33] : memref<8x12x128xf32, #tpu.memory_space<vmem>>, vector<8x8x128xf32>
    %cst_34 = arith.constant -3.1185375E-18 : f32
    %26 = vector.broadcast %cst_34 : f32 to vector<8x8x128xf32>
    %27 = arith.mulf %26, %25 : vector<8x8x128xf32>
    %28 = arith.addf %24, %27 : vector<8x8x128xf32>
    %c2_35 = arith.constant 2 : index
    %c0_36 = arith.constant 0 : index
    %c0_37 = arith.constant 0 : index
    %29 = vector.load %arg4[%c2_35, %c0_36, %c0_37] : memref<12x8x128xf32, #tpu.memory_space<vmem>>, vector<8x8x128xf32>
    tpu.vector_store %arg4[%c2_35, %c0_36, %c0_37], %28 {strides = array<i32>} : memref<12x8x128xf32, #tpu.memory_space<vmem>>, vector<8x8x128xf32>,
    %c0_38 = arith.constant 0 : index
    %c0_39 = arith.constant 0 : index
    %c0_40 = arith.constant 0 : index
    %30 = vector.load %arg4[%c0_38, %c0_39, %c0_40] : memref<12x8x128xf32, #tpu.memory_space<vmem>>, vector<8x8x128xf32>
    %cst_41 = arith.constant -3.1185375E-18 : f32
    %31 = vector.broadcast %cst_41 : f32 to vector<8x8x128xf32>
    %32 = arith.mulf %31, %30 : vector<8x8x128xf32>
    %c1_42 = arith.constant 1 : index
    %c0_43 = arith.constant 0 : index
    %c0_44 = arith.constant 0 : index
    %33 = vector.load %arg4[%c1_42, %c0_43, %c0_44] : memref<12x8x128xf32, #tpu.memory_space<vmem>>, vector<8x8x128xf32>
    %cst_45 = arith.constant 2.10501286E-17 : f32
    %34 = vector.broadcast %cst_45 : f32 to vector<8x8x128xf32>
    %35 = arith.mulf %34, %33 : vector<8x8x128xf32>
    %36 = arith.addf %32, %35 : vector<8x8x128xf32>
    %c2_46 = arith.constant 2 : index
    %c0_47 = arith.constant 0 : index
    %c0_48 = arith.constant 0 : index
    %37 = vector.load %arg4[%c2_46, %c0_47, %c0_48] : memref<12x8x128xf32, #tpu.memory_space<vmem>>, vector<8x8x128xf32>
    %cst_49 = arith.constant 1.000000e+00 : f32
    %38 = vector.broadcast %cst_49 : f32 to vector<8x8x128xf32>
    %39 = arith.mulf %38, %37 : vector<8x8x128xf32>
    %40 = arith.addf %36, %39 : vector<8x8x128xf32>
    %c3_50 = arith.constant 3 : index
    %c0_51 = arith.constant 0 : index
    %c0_52 = arith.constant 0 : index
    %41 = vector.load %arg4[%c3_50, %c0_51, %c0_52] : memref<12x8x128xf32, #tpu.memory_space<vmem>>, vector<8x8x128xf32>
    %cst_53 = arith.constant 2.10501286E-17 : f32
    %42 = vector.broadcast %cst_53 : f32 to vector<8x8x128xf32>
    %43 = arith.mulf %42, %41 : vector<8x8x128xf32>
    %44 = arith.addf %40, %43 : vector<8x8x128xf32>
    %c4_54 = arith.constant 4 : index
    %c0_55 = arith.constant 0 : index
    %c0_56 = arith.constant 0 : index
    %45 = vector.load %arg4[%c4_54, %c0_55, %c0_56] : memref<12x8x128xf32, #tpu.memory_space<vmem>>, vector<8x8x128xf32>
    %cst_57 = arith.constant -3.1185375E-18 : f32
    %46 = vector.broadcast %cst_57 : f32 to vector<8x8x128xf32>
    %47 = arith.mulf %46, %45 : vector<8x8x128xf32>
    %48 = arith.addf %44, %47 : vector<8x8x128xf32>
    %c0_58 = arith.constant 0 : index
    %c0_59 = arith.constant 0 : index
    %c0_60 = arith.constant 0 : index
    %49 = vector.load %arg2[%c0_58, %c0_59, %c0_60] : memref<8x8x128xf32, #tpu.memory_space<vmem>>, vector<8x8x128xf32>
    tpu.vector_store %arg2[%c0_58, %c0_59, %c0_60], %48 {strides = array<i32>} : memref<8x8x128xf32, #tpu.memory_space<vmem>>, vector<8x8x128xf32>,
    return
  }
  func.func @transform_0(%arg0: i32) -> (i32, i32, i32) {
    %c0_i32 = arith.constant 0 : i32
    %c0_i32_0 = arith.constant 0 : i32
    %c0_i32_1 = arith.constant 0 : i32
    return %c0_i32, %c0_i32_0, %arg0 : i32, i32, i32
  }
  func.func @transform_1(%arg0: i32) -> (i32, i32, i32) {
    %c0_i32 = arith.constant 0 : i32
    %c0_i32_0 = arith.constant 0 : i32
    %c0_i32_1 = arith.constant 0 : i32
    return %c0_i32, %c0_i32_0, %arg0 : i32, i32, i32
  }
}

</mosaic_0001>

<llo_original>
// kernel: tpu_custom_call.1
$region0: #{tpu_custom_call.1}
  #allocation0 [shape = 'u32[]', space=smem, size = 0x4, offset = 0x4, fixed_abs, tag = 'smem constant byte address 0x4 - core index']
  #allocation1 [shape = 'u32[72,128]{1,0:T(1,128)}', space=vmem, size = 0x9000, scoped, tag = 'internal scratch']
  #allocation2 [shape = 'f32[8,12,128]{2,1,0:T(8,128)}', space=vmem, size = 0x10000, scoped, tag = 'scratch operand']
  #allocation3 [shape = 'f32[12,8,128]{2,1,0:T(8,128)}', space=vmem, size = 0xc000, scoped, tag = 'scratch operand']
  %s0 = inlined_call_operand.hbm [shape: f32[8,8,128], index: 0, kind: input, shape index: {}]
  %s1 = inlined_call_operand.hbm [shape: f32[8,8,128], index: 1, kind: output, shape index: {}]
  %s2 = sld [smem:[#allocation0]]
  $region18: #{tpu_custom_call.1} parent=0
    _
  %s4 = ssub.s32 1, %s2
  %s5 = scalar_select 0, %s4, %s2
  $region1: #{tpu_custom_call.1} parent=0
    #allocation4 [shape = 'u8[32768]{0}', space=vmem, size = 0x8000, scoped, tag = 'input window, operand 0, single buffered']
    #allocation5 [shape = 's32[1]{0}', space=sflag, size = 0x4, scoped, tag = 'scoped memory for tpu_custom_call.1']
    #allocation6 [shape = 's32[1]{0}', space=sflag, size = 0x4, scoped, tag = 'scoped memory for tpu_custom_call.1']
    #allocation7 [shape = 'u8[32768]{0}', space=vmem, size = 0x8000, scoped, tag = 'output window, operand 0, single buffered']
    %6 = vsyncpa [#allocation5], 0
    %7 = vsyncpa [#allocation6], 0
    // Predicated region
    $region2: #{tpu_custom_call.1} parent=1 // pred_check
      _
    $region3: #{tpu_custom_call.1} parent=1 // pred_check_branch
      %9 = sbr.rel (0) target = $region5
    $region4: #{tpu_custom_call.1} parent=1 // pred_region
      %11 = vsyncadd [#allocation5], 0
      %s12 = sshll.u32 %s0, 4
      %s13 = int_to_ptr.hbm [resolvable:$true] %s12
      %s14 = sshll.u32 [#allocation4], 4
      %s15 = int_to_ptr.vmem [resolvable:$true] %s14
      %20 = dma.hbm_to_vmem [thread:$0]  %s13, 1024, %s15, [#allocation5], 128, 128, 8
    $region5: #{tpu_custom_call.1} parent=1 // pred_fallthru
      _
    // Predicated region
    $region6: #{tpu_custom_call.1} parent=1 // pred_check
      _
    $region7: #{tpu_custom_call.1} parent=1 // pred_check_branch
      %22 = sbr.rel (0) target = $region9
    $region8: #{tpu_custom_call.1} parent=1 // pred_region
      %24 = dma.done [#allocation5], 1024
    $region9: #{tpu_custom_call.1} parent=1 // pred_fallthru
      _
    %25 = vst [vmem:[#allocation2] sm:$0x3] 0.0
    %26 = vst [vmem:[#allocation2 + $0x10] sm:$0x3] 0.0
    %27 = vst [vmem:[#allocation2 + $0x20] sm:$0x3] 0.0
    %28 = vst [vmem:[#allocation2 + $0x30] sm:$0x3] 0.0
    %29 = vst [vmem:[#allocation2 + $0x40] sm:$0x3] 0.0
    %30 = vst [vmem:[#allocation2 + $0x50] sm:$0x3] 0.0
    %31 = vst [vmem:[#allocation2 + $0x60] sm:$0x3] 0.0
    %32 = vst [vmem:[#allocation2 + $0x70] sm:$0x3] 0.0
    %33 = vst [vmem:[#allocation2 + $0xa] sm:$0x3] 0.0
    %34 = vst [vmem:[#allocation2 + $0x1a] sm:$0x3] 0.0
    %35 = vst [vmem:[#allocation2 + $0x2a] sm:$0x3] 0.0
    %36 = vst [vmem:[#allocation2 + $0x3a] sm:$0x3] 0.0
    %37 = vst [vmem:[#allocation2 + $0x4a] sm:$0x3] 0.0
    %38 = vst [vmem:[#allocation2 + $0x5a] sm:$0x3] 0.0
    %39 = vst [vmem:[#allocation2 + $0x6a] sm:$0x3] 0.0
    %40 = vst [vmem:[#allocation2 + $0x7a] sm:$0x3] 0.0
    %v41 = vld [vmem:[#allocation4] sm:$0xff]
    %v42 = vld [vmem:[#allocation4 + $0x8] sm:$0xff]
    %v43 = vld [vmem:[#allocation4 + $0x10] sm:$0xff]
    %v44 = vld [vmem:[#allocation4 + $0x18] sm:$0xff]
    %v45 = vld [vmem:[#allocation4 + $0x20] sm:$0xff]
    %v46 = vld [vmem:[#allocation4 + $0x28] sm:$0xff]
    %v47 = vld [vmem:[#allocation4 + $0x30] sm:$0xff]
    %v48 = vld [vmem:[#allocation4 + $0x38] sm:$0xff]
    %49 = vst [vmem:[#allocation2 + $0x2] sm:$0xff] %v41
    %50 = vst [vmem:[#allocation2 + $0x12] sm:$0xff] %v42
    %51 = vst [vmem:[#allocation2 + $0x22] sm:$0xff] %v43
    %52 = vst [vmem:[#allocation2 + $0x32] sm:$0xff] %v44
    %53 = vst [vmem:[#allocation2 + $0x42] sm:$0xff] %v45
    %54 = vst [vmem:[#allocation2 + $0x52] sm:$0xff] %v46
    %55 = vst [vmem:[#allocation2 + $0x62] sm:$0xff] %v47
    %56 = vst [vmem:[#allocation2 + $0x72] sm:$0xff] %v48
    %57 = vst [vmem:[#allocation3] sm:$0xff] 0.0
    %58 = vst [vmem:[#allocation3 + $0x8] sm:$0xff] 0.0
    %s59 = scalar_lea.vmem [#allocation3], 80
    %60 = vst [vmem:[%s59] sm:$0xff] 0.0
    %61 = vst [vmem:[%s59 + $0x8] sm:$0xff] 0.0
    %v62 = vld [vmem:[#allocation2] sm:$0xff]
    %v63 = vld [vmem:[#allocation2 + $0x10] sm:$0xff]
    %v64 = vld [vmem:[#allocation2 + $0x20] sm:$0xff]
    %v65 = vld [vmem:[#allocation2 + $0x30] sm:$0xff]
    %v66 = vld [vmem:[#allocation2 + $0x40] sm:$0xff]
    %v67 = vld [vmem:[#allocation2 + $0x50] sm:$0xff]
    %v68 = vld [vmem:[#allocation2 + $0x60] sm:$0xff]
    %v69 = vld [vmem:[#allocation2 + $0x70] sm:$0xff]
    %v70 = vmul.f32 %v62, -3.1185375e-18
    %v71 = vmul.f32 %v63, -3.1185375e-18
    %v72 = vmul.f32 %v64, -3.1185375e-18
    %v73 = vmul.f32 %v65, -3.1185375e-18
    %v74 = vmul.f32 %v66, -3.1185375e-18
    %v75 = vmul.f32 %v67, -3.1185375e-18
    %v76 = vmul.f32 %v68, -3.1185375e-18
    %v77 = vmul.f32 %v69, -3.1185375e-18
    %v78 = vld [vmem:[#allocation2 + $0x1] sm:$0xff]
    %v79 = vld [vmem:[#allocation2 + $0x11] sm:$0xff]
    %v80 = vld [vmem:[#allocation2 + $0x21] sm:$0xff]
    %v81 = vld [vmem:[#allocation2 + $0x31] sm:$0xff]
    %v82 = vld [vmem:[#allocation2 + $0x41] sm:$0xff]
    %v83 = vld [vmem:[#allocation2 + $0x51] sm:$0xff]
    %v84 = vld [vmem:[#allocation2 + $0x61] sm:$0xff]
    %v85 = vld [vmem:[#allocation2 + $0x71] sm:$0xff]
    %v86 = vmul.f32 %v78, 2.1050129e-17
    %v87 = vmul.f32 %v79, 2.1050129e-17
    %v88 = vmul.f32 %v80, 2.1050129e-17
    %v89 = vmul.f32 %v81, 2.1050129e-17
    %v90 = vmul.f32 %v82, 2.1050129e-17
    %v91 = vmul.f32 %v83, 2.1050129e-17
    %v92 = vmul.f32 %v84, 2.1050129e-17
    %v93 = vmul.f32 %v85, 2.1050129e-17
    %v94 = vadd.f32 %v70, %v86
    %v95 = vadd.f32 %v71, %v87
    %v96 = vadd.f32 %v72, %v88
    %v97 = vadd.f32 %v73, %v89
    %v98 = vadd.f32 %v74, %v90
    %v99 = vadd.f32 %v75, %v91
    %v100 = vadd.f32 %v76, %v92
    %v101 = vadd.f32 %v77, %v93
    %v102 = vld [vmem:[#allocation2 + $0x2] sm:$0xff]
    %v103 = vld [vmem:[#allocation2 + $0x12] sm:$0xff]
    %v104 = vld [vmem:[#allocation2 + $0x22] sm:$0xff]
    %v105 = vld [vmem:[#allocation2 + $0x32] sm:$0xff]
    %v106 = vld [vmem:[#allocation2 + $0x42] sm:$0xff]
    %v107 = vld [vmem:[#allocation2 + $0x52] sm:$0xff]
    %v108 = vld [vmem:[#allocation2 + $0x62] sm:$0xff]
    %v109 = vld [vmem:[#allocation2 + $0x72] sm:$0xff]
    %v110 = vadd.f32 %v94, %v102
    %v111 = vadd.f32 %v95, %v103
    %v112 = vadd.f32 %v96, %v104
    %v113 = vadd.f32 %v97, %v105
    %v114 = vadd.f32 %v98, %v106
    %v115 = vadd.f32 %v99, %v107
    %v116 = vadd.f32 %v100, %v108
    %v117 = vadd.f32 %v101, %v109
    %v118 = vld [vmem:[#allocation2 + $0x3] sm:$0xff]
    %v119 = vld [vmem:[#allocation2 + $0x13] sm:$0xff]
    %v120 = vld [vmem:[#allocation2 + $0x23] sm:$0xff]
    %v121 = vld [vmem:[#allocation2 + $0x33] sm:$0xff]
    %v122 = vld [vmem:[#allocation2 + $0x43] sm:$0xff]
    %v123 = vld [vmem:[#allocation2 + $0x53] sm:$0xff]
    %v124 = vld [vmem:[#allocation2 + $0x63] sm:$0xff]
    %v125 = vld [vmem:[#allocation2 + $0x73] sm:$0xff]
    %v126 = vmul.f32 %v118, 2.1050129e-17
    %v127 = vmul.f32 %v119, 2.1050129e-17
    %v128 = vmul.f32 %v120, 2.1050129e-17
    %v129 = vmul.f32 %v121, 2.1050129e-17
    %v130 = vmul.f32 %v122, 2.1050129e-17
    %v131 = vmul.f32 %v123, 2.1050129e-17
    %v132 = vmul.f32 %v124, 2.1050129e-17
    %v133 = vmul.f32 %v125, 2.1050129e-17
    %v134 = vadd.f32 %v110, %v126
    %v135 = vadd.f32 %v111, %v127
    %v136 = vadd.f32 %v112, %v128
    %v137 = vadd.f32 %v113, %v129
    %v138 = vadd.f32 %v114, %v130
    %v139 = vadd.f32 %v115, %v131
    %v140 = vadd.f32 %v116, %v132
    %v141 = vadd.f32 %v117, %v133
    %v142 = vld [vmem:[#allocation2 + $0x4] sm:$0xff]
    %v143 = vld [vmem:[#allocation2 + $0x14] sm:$0xff]
    %v144 = vld [vmem:[#allocation2 + $0x24] sm:$0xff]
    %v145 = vld [vmem:[#allocation2 + $0x34] sm:$0xff]
    %v146 = vld [vmem:[#allocation2 + $0x44] sm:$0xff]
    %v147 = vld [vmem:[#allocation2 + $0x54] sm:$0xff]
    %v148 = vld [vmem:[#allocation2 + $0x64] sm:$0xff]
    %v149 = vld [vmem:[#allocation2 + $0x74] sm:$0xff]
    %v150 = vmul.f32 %v142, -3.1185375e-18
    %v151 = vmul.f32 %v143, -3.1185375e-18
    %v152 = vmul.f32 %v144, -3.1185375e-18
    %v153 = vmul.f32 %v145, -3.1185375e-18
    %v154 = vmul.f32 %v146, -3.1185375e-18
    %v155 = vmul.f32 %v147, -3.1185375e-18
    %v156 = vmul.f32 %v148, -3.1185375e-18
    %v157 = vmul.f32 %v149, -3.1185375e-18
    %v158 = vadd.f32 %v134, %v150
    %v159 = vadd.f32 %v135, %v151
    %v160 = vadd.f32 %v136, %v152
    %v161 = vadd.f32 %v137, %v153
    %v162 = vadd.f32 %v138, %v154
    %v163 = vadd.f32 %v139, %v155
    %v164 = vadd.f32 %v140, %v156
    %v165 = vadd.f32 %v141, %v157
    %s166 = scalar_lea.vmem [#allocation3], 16
    %167 = vst [vmem:[%s166] sm:$0xff] %v158
    %168 = vst [vmem:[%s166 + $0x8] sm:$0xff] %v159
    %169 = vst [vmem:[%s166 + $0x10] sm:$0xff] %v160
    %170 = vst [vmem:[%s166 + $0x18] sm:$0xff] %v161
    %171 = vst [vmem:[%s166 + $0x20] sm:$0xff] %v162
    %172 = vst [vmem:[%s166 + $0x28] sm:$0xff] %v163
    %173 = vst [vmem:[%s166 + $0x30] sm:$0xff] %v164
    %174 = vst [vmem:[%s166 + $0x38] sm:$0xff] %v165
    %v175 = vld [vmem:[#allocation3] sm:$0xff]
    %v176 = vld [vmem:[#allocation3 + $0x8] sm:$0xff]
    %v177 = vld [vmem:[#allocation3 + $0x10] sm:$0xff]
    %v178 = vld [vmem:[#allocation3 + $0x18] sm:$0xff]
    %v179 = vld [vmem:[#allocation3 + $0x20] sm:$0xff]
    %v180 = vld [vmem:[#allocation3 + $0x28] sm:$0xff]
    %v181 = vld [vmem:[#allocation3 + $0x30] sm:$0xff]
    %v182 = vld [vmem:[#allocation3 + $0x38] sm:$0xff]
    %v183 = vmul.f32 %v175, -3.1185375e-18
    %v184 = vmul.f32 %v176, -3.1185375e-18
    %v185 = vmul.f32 %v177, -3.1185375e-18
    %v186 = vmul.f32 %v178, -3.1185375e-18
    %v187 = vmul.f32 %v179, -3.1185375e-18
    %v188 = vmul.f32 %v180, -3.1185375e-18
    %v189 = vmul.f32 %v181, -3.1185375e-18
    %v190 = vmul.f32 %v182, -3.1185375e-18
    %s191 = scalar_lea.vmem [#allocation3], 8
    %v192 = vld [vmem:[%s191] sm:$0xff]
    %v193 = vld [vmem:[%s191 + $0x8] sm:$0xff]
    %v194 = vld [vmem:[%s191 + $0x10] sm:$0xff]
    %v195 = vld [vmem:[%s191 + $0x18] sm:$0xff]
    %v196 = vld [vmem:[%s191 + $0x20] sm:$0xff]
    %v197 = vld [vmem:[%s191 + $0x28] sm:$0xff]
    %v198 = vld [vmem:[%s191 + $0x30] sm:$0xff]
    %v199 = vld [vmem:[%s191 + $0x38] sm:$0xff]
    %v200 = vmul.f32 %v192, 2.1050129e-17
    %v201 = vmul.f32 %v193, 2.1050129e-17
    %v202 = vmul.f32 %v194, 2.1050129e-17
    %v203 = vmul.f32 %v195, 2.1050129e-17
    %v204 = vmul.f32 %v196, 2.1050129e-17
    %v205 = vmul.f32 %v197, 2.1050129e-17
    %v206 = vmul.f32 %v198, 2.1050129e-17
    %v207 = vmul.f32 %v199, 2.1050129e-17
    %v208 = vadd.f32 %v183, %v200
    %v209 = vadd.f32 %v184, %v201
    %v210 = vadd.f32 %v185, %v202
    %v211 = vadd.f32 %v186, %v203
    %v212 = vadd.f32 %v187, %v204
    %v213 = vadd.f32 %v188, %v205
    %v214 = vadd.f32 %v189, %v206
    %v215 = vadd.f32 %v190, %v207
    %v216 = vld [vmem:[%s166] sm:$0xff]
    %v217 = vld [vmem:[%s166 + $0x8] sm:$0xff]
    %v218 = vld [vmem:[%s166 + $0x10] sm:$0xff]
    %v219 = vld [vmem:[%s166 + $0x18] sm:$0xff]
    %v220 = vld [vmem:[%s166 + $0x20] sm:$0xff]
    %v221 = vld [vmem:[%s166 + $0x28] sm:$0xff]
    %v222 = vld [vmem:[%s166 + $0x30] sm:$0xff]
    %v223 = vld [vmem:[%s166 + $0x38] sm:$0xff]
    %v224 = vadd.f32 %v208, %v216
    %v225 = vadd.f32 %v209, %v217
    %v226 = vadd.f32 %v210, %v218
    %v227 = vadd.f32 %v211, %v219
    %v228 = vadd.f32 %v212, %v220
    %v229 = vadd.f32 %v213, %v221
    %v230 = vadd.f32 %v214, %v222
    %v231 = vadd.f32 %v215, %v223
    %s232 = scalar_lea.vmem [#allocation3], 24
    %v233 = vld [vmem:[%s232] sm:$0xff]
    %v234 = vld [vmem:[%s232 + $0x8] sm:$0xff]
    %v235 = vld [vmem:[%s232 + $0x10] sm:$0xff]
    %v236 = vld [vmem:[%s232 + $0x18] sm:$0xff]
    %v237 = vld [vmem:[%s232 + $0x20] sm:$0xff]
    %v238 = vld [vmem:[%s232 + $0x28] sm:$0xff]
    %v239 = vld [vmem:[%s232 + $0x30] sm:$0xff]
    %v240 = vld [vmem:[%s232 + $0x38] sm:$0xff]
    %v241 = vmul.f32 %v233, 2.1050129e-17
    %v242 = vmul.f32 %v234, 2.1050129e-17
    %v243 = vmul.f32 %v235, 2.1050129e-17
    %v244 = vmul.f32 %v236, 2.1050129e-17
    %v245 = vmul.f32 %v237, 2.1050129e-17
    %v246 = vmul.f32 %v238, 2.1050129e-17
    %v247 = vmul.f32 %v239, 2.1050129e-17
    %v248 = vmul.f32 %v240, 2.1050129e-17
    %v249 = vadd.f32 %v224, %v241
    %v250 = vadd.f32 %v225, %v242
    %v251 = vadd.f32 %v226, %v243
    %v252 = vadd.f32 %v227, %v244
    %v253 = vadd.f32 %v228, %v245
    %v254 = vadd.f32 %v229, %v246
    %v255 = vadd.f32 %v230, %v247
    %v256 = vadd.f32 %v231, %v248
    %s257 = scalar_lea.vmem [#allocation3], 32
    %v258 = vld [vmem:[%s257] sm:$0xff]
    %v259 = vld [vmem:[%s257 + $0x8] sm:$0xff]
    %v260 = vld [vmem:[%s257 + $0x10] sm:$0xff]
    %v261 = vld [vmem:[%s257 + $0x18] sm:$0xff]
    %v262 = vld [vmem:[%s257 + $0x20] sm:$0xff]
    %v263 = vld [vmem:[%s257 + $0x28] sm:$0xff]
    %v264 = vld [vmem:[%s257 + $0x30] sm:$0xff]
    %v265 = vld [vmem:[%s257 + $0x38] sm:$0xff]
    %v266 = vmul.f32 %v258, -3.1185375e-18
    %v267 = vmul.f32 %v259, -3.1185375e-18
    %v268 = vmul.f32 %v260, -3.1185375e-18
    %v269 = vmul.f32 %v261, -3.1185375e-18
    %v270 = vmul.f32 %v262, -3.1185375e-18
    %v271 = vmul.f32 %v263, -3.1185375e-18
    %v272 = vmul.f32 %v264, -3.1185375e-18
    %v273 = vmul.f32 %v265, -3.1185375e-18
    %v274 = vadd.f32 %v249, %v266
    %v275 = vadd.f32 %v250, %v267
    %v276 = vadd.f32 %v251, %v268
    %v277 = vadd.f32 %v252, %v269
    %v278 = vadd.f32 %v253, %v270
    %v279 = vadd.f32 %v254, %v271
    %v280 = vadd.f32 %v255, %v272
    %v281 = vadd.f32 %v256, %v273
    %282 = vst [vmem:[#allocation7] sm:$0xff] %v274
    %283 = vst [vmem:[#allocation7 + $0x8] sm:$0xff] %v275
    %284 = vst [vmem:[#allocation7 + $0x10] sm:$0xff] %v276
    %285 = vst [vmem:[#allocation7 + $0x18] sm:$0xff] %v277
    %286 = vst [vmem:[#allocation7 + $0x20] sm:$0xff] %v278
    %287 = vst [vmem:[#allocation7 + $0x28] sm:$0xff] %v279
    %288 = vst [vmem:[#allocation7 + $0x30] sm:$0xff] %v280
    %289 = vst [vmem:[#allocation7 + $0x38] sm:$0xff] %v281
    // Predicated region
    $region10: #{tpu_custom_call.1} parent=1 // pred_check
      _
    $region11: #{tpu_custom_call.1} parent=1 // pred_check_branch
      %291 = sbr.rel (0) target = $region13
    $region12: #{tpu_custom_call.1} parent=1 // pred_region
      %293 = vsyncadd [#allocation6], 0
      %s294 = sshll.u32 [#allocation7], 4
      %s295 = int_to_ptr.vmem [resolvable:$true] %s294
      %s296 = sshll.u32 %s1, 4
      %s297 = int_to_ptr.hbm [resolvable:$true] %s296
      %302 = dma.vmem_to_hbm [thread:$0]  %s295, 1024, %s297, [#allocation6], 128, 128, 8
    $region13: #{tpu_custom_call.1} parent=1 // pred_fallthru
      _
    // Predicated region
    $region14: #{tpu_custom_call.1} parent=1 // pred_check
      _
    $region15: #{tpu_custom_call.1} parent=1 // pred_check_branch
      %304 = sbr.rel (0) target = $region17
    $region16: #{tpu_custom_call.1} parent=1 // pred_region
      %306 = dma.done [#allocation6], 1024
    $region17: #{tpu_custom_call.1} parent=1 // pred_fallthru
      _
    %307 = vsyncpa [#allocation5], 1
    %308 = vsyncpa [#allocation6], 1

</llo_original>
